<compile_context>
chip_gen: v6e
topology: v6e:2x2x1
jax: 0.10.0
libtpu: 0.0.40
codegen_flags: <defaults>
</compile_context>

<pallas_src>
import jax
import jax.numpy as jnp
from jax.experimental import pallas as pl
from jax.experimental.pallas import tpu as pltpu

STATE_DIM = 3    # pendulum observation dim
ACTION_DIM = 1
H1 = 64
H2 = 32


def _round_up(x, m):
    return ((x + m - 1) // m) * m


def critic_kernel(state_ref, action_ref,
                  w1s_ref, w1a_ref, b1_ref,
                  w2_ref, b2_ref, w3_ref, b3_ref,
                  q_ref):
    st = state_ref[...]           # (STATE_DIM, TM)
    at = action_ref[...]          # (ACTION_DIM, TM) == (1, TM)

    # fc1: split weight replaces torch.cat([state, action], 1)
    #   state part  -> MXU matmul           (H1, 3) @ (3, TM)
    #   action part -> rank-1 VPU broadcast (H1, 1) * (1, TM)
    h = jnp.dot(w1s_ref[...], st, preferred_element_type=jnp.float32)
    h = h + w1a_ref[...] * at + b1_ref[...]
    h = jnp.maximum(h, 0.0)                                        # (H1, TM)

    # fc2 + relu
    h = jnp.dot(w2_ref[...], h, preferred_element_type=jnp.float32) + b2_ref[...]
    h = jnp.maximum(h, 0.0)                                        # (H2, TM)

    # fc3 (no activation) -> lane-dense (1, TM) row
    q = jnp.dot(w3_ref[...], h, preferred_element_type=jnp.float32) + b3_ref[...]
    q_ref[...] = q.astype(q_ref.dtype)


def critic_forward(state, action, params, *, tile_batch=1024):
    """state: (B, STATE_DIM), action: (B, ACTION_DIM) -> q: (B, 1).

    params follow the PyTorch nn.Linear convention: W is (out, in), b is (out, 1).
    """
    w1, b1, w2, b2, w3, b3 = params
    B = state.shape[0]

    # Batch tile: multiple of 128 (vreg lane width), capped by tile_batch.
    tm = int(min(tile_batch, _round_up(B, 128)))
    b_pad = _round_up(B, tm)
    grid = (b_pad // tm,)

    # (features, batch) layout; zero-pad the batch tail so tiles divide evenly.
    state_t = jnp.pad(state.astype(jnp.float32).T, ((0, 0), (0, b_pad - B)))
    action_t = jnp.pad(action.astype(jnp.float32).T, ((0, 0), (0, b_pad - B)))

    # Split fc1's weight so the kernel never concatenates state and action.
    w1s = w1[:, :STATE_DIM]      # (H1, STATE_DIM)
    w1a = w1[:, STATE_DIM:]      # (H1, ACTION_DIM)

    def batch_spec(feat):
        # tiles the lane (batch) axis; feature axis is the full (tiny) extent
        return pl.BlockSpec((feat, tm), lambda i: (0, i))

    def const_spec(shape):
        # whole array, same block every grid step -> stays VMEM-resident
        return pl.BlockSpec(shape, lambda i: (0, 0))

    q_t = pl.pallas_call(
        critic_kernel,
        out_shape=jax.ShapeDtypeStruct((1, b_pad), jnp.float32),
        grid=grid,
        in_specs=[
            batch_spec(STATE_DIM),
            batch_spec(ACTION_DIM),
            const_spec(w1s.shape), const_spec(w1a.shape), const_spec(b1.shape),
            const_spec(w2.shape), const_spec(b2.shape),
            const_spec(w3.shape), const_spec(b3.shape),
        ],
        out_specs=batch_spec(1),
        compiler_params=pltpu.CompilerParams(
            dimension_semantics=("parallel",)),
    )(state_t, action_t, w1s, w1a, b1, w2, b2, w3, b3)

    return q_t[:, :B].T          # (B, 1)


def init_params(key):
    """PyTorch-style init: W ~ U(-1/sqrt(fan_in), 1/sqrt(fan_in)), W is (out, in)."""
    ks = jax.random.split(key, 6)

    def linear(kw, kb, fan_in, fan_out):
        bound = 1.0 / jnp.sqrt(jnp.float32(fan_in))
        w = jax.random.uniform(kw, (fan_out, fan_in), jnp.float32, -bound, bound)
        b = jax.random.uniform(kb, (fan_out, 1), jnp.float32, -bound, bound)
        return w, b

    w1, b1 = linear(ks[0], ks[1], STATE_DIM + ACTION_DIM, H1)
    w2, b2 = linear(ks[2], ks[3], H1, H2)
    w3, b3 = linear(ks[4], ks[5], H2, 1)
    return (w1, b1, w2, b2, w3, b3)


def reference_forward(state, action, params):
    w1, b1, w2, b2, w3, b3 = params
    sa = jnp.concatenate([state, action], axis=1)
    h = jax.nn.relu(sa @ w1.T + b1.T)
    h = jax.nn.relu(h @ w2.T + b2.T)
    return h @ w3.T + b3.T


if __name__ == "__main__":
    key = jax.random.PRNGKey(0)
    k_params, k_state, k_action = jax.random.split(key, 3)

    params = init_params(k_params)

    # Small primary test (B = 8, matching the module's typical usage).
    B = 8
    state = jax.random.normal(k_state, (B, STATE_DIM), jnp.float32)
    action = jax.random.normal(k_action, (B, ACTION_DIM), jnp.float32)

    q = jax.block_until_ready(critic_forward(state, action, params))
    q_ref = reference_forward(state, action, params)
    assert q.shape == (B, 1)
    assert jnp.allclose(q, q_ref, atol=1e-5, rtol=1e-5)

    # Multi-tile + ragged-tail test: exercises the batch grid and padding path.
    B2 = 300
    state2 = jax.random.normal(jax.random.PRNGKey(1), (B2, STATE_DIM), jnp.float32)
    action2 = jax.random.normal(jax.random.PRNGKey(2), (B2, ACTION_DIM), jnp.float32)
    q2 = jax.block_until_ready(
        critic_forward(state2, action2, params, tile_batch=128))
    q2_ref = reference_forward(state2, action2, params)
    assert q2.shape == (B2, 1)
    assert jnp.allclose(q2, q2_ref, atol=1e-5, rtol=1e-5)

    print("KERNEL_OK")
</pallas_src>

<mosaic_0001>
module attributes {stable_mosaic.version = 11 : i64} {
  func.func @critic_kernel(%arg0: i32, %arg1: memref<3x128xf32, #tpu.memory_space<vmem>>, %arg2: memref<1x128xf32, #tpu.memory_space<vmem>>, %arg3: memref<64x3xf32, #tpu.memory_space<vmem>>, %arg4: memref<64x1xf32, #tpu.memory_space<vmem>>, %arg5: memref<64x1xf32, #tpu.memory_space<vmem>>, %arg6: memref<32x64xf32, #tpu.memory_space<vmem>>, %arg7: memref<32x1xf32, #tpu.memory_space<vmem>>, %arg8: memref<1x32xf32, #tpu.memory_space<vmem>>, %arg9: memref<1x1xf32, #tpu.memory_space<vmem>>, %arg10: memref<1x128xf32, #tpu.memory_space<vmem>>) attributes {dimension_semantics = [#tpu.dimension_semantics<parallel>], iteration_bounds = array<i64: 1>, scalar_prefetch = 0 : i64, scratch_operands = 0 : i64, tpu.core_type = #tpu.core_type<tc>, window_params = [{transform_indices = @transform_0, window_bounds = array<i64: 3, 128>}, {transform_indices = @transform_1, window_bounds = array<i64: 1, 128>}, {pipeline_mode = #tpu.pipeline_mode<synchronous>, transform_indices = @transform_2, window_bounds = array<i64: 64, 3>}, {pipeline_mode = #tpu.pipeline_mode<synchronous>, transform_indices = @transform_3, window_bounds = array<i64: 64, 1>}, {pipeline_mode = #tpu.pipeline_mode<synchronous>, transform_indices = @transform_4, window_bounds = array<i64: 64, 1>}, {pipeline_mode = #tpu.pipeline_mode<synchronous>, transform_indices = @transform_5, window_bounds = array<i64: 32, 64>}, {pipeline_mode = #tpu.pipeline_mode<synchronous>, transform_indices = @transform_6, window_bounds = array<i64: 32, 1>}, {pipeline_mode = #tpu.pipeline_mode<synchronous>, transform_indices = @transform_7, window_bounds = array<i64: 1, 32>}, {pipeline_mode = #tpu.pipeline_mode<synchronous>, transform_indices = @transform_8, window_bounds = array<i64: 1, 1>}, {transform_indices = @transform_9, window_bounds = array<i64: 1, 128>}]} {
    %c0 = arith.constant 0 : index
    %c0_0 = arith.constant 0 : index
    %0 = vector.load %arg1[%c0, %c0_0] : memref<3x128xf32, #tpu.memory_space<vmem>>, vector<3x128xf32>
    %c0_1 = arith.constant 0 : index
    %c0_2 = arith.constant 0 : index
    %1 = vector.load %arg2[%c0_1, %c0_2] : memref<1x128xf32, #tpu.memory_space<vmem>>, vector<1x128xf32>
    %c0_3 = arith.constant 0 : index
    %c0_4 = arith.constant 0 : index
    %2 = vector.load %arg3[%c0_3, %c0_4] : memref<64x3xf32, #tpu.memory_space<vmem>>, vector<64x3xf32>
    %cst = arith.constant dense<0.000000e+00> : vector<64x128xf32>
    %3 = tpu.matmul %2, %0, %cst {dimension_numbers = #tpu.dot_dimension_numbers<[1], [0], [0], [1], [0, 0, 1, 1], [], []>} : vector<64x3xf32>, vector<3x128xf32>, vector<64x128xf32> -> vector<64x128xf32>
    %c0_5 = arith.constant 0 : index
    %c0_6 = arith.constant 0 : index
    %4 = vector.load %arg4[%c0_5, %c0_6] : memref<64x1xf32, #tpu.memory_space<vmem>>, vector<64x1xf32>
    %5 = vector.broadcast %4 : vector<64x1xf32> to vector<64x128xf32>
    %6 = vector.broadcast %1 : vector<1x128xf32> to vector<64x128xf32>
    %7 = arith.mulf %5, %6 : vector<64x128xf32>
    %8 = arith.addf %3, %7 : vector<64x128xf32>
    %c0_7 = arith.constant 0 : index
    %c0_8 = arith.constant 0 : index
    %9 = vector.load %arg5[%c0_7, %c0_8] : memref<64x1xf32, #tpu.memory_space<vmem>>, vector<64x1xf32>
    %10 = vector.broadcast %9 : vector<64x1xf32> to vector<64x128xf32>
    %11 = arith.addf %8, %10 : vector<64x128xf32>
    %cst_9 = arith.constant 0.000000e+00 : f32
    %12 = vector.broadcast %cst_9 : f32 to vector<64x128xf32>
    %13 = arith.maximumf %11, %12 : vector<64x128xf32>
    %c0_10 = arith.constant 0 : index
    %c0_11 = arith.constant 0 : index
    %14 = vector.load %arg6[%c0_10, %c0_11] : memref<32x64xf32, #tpu.memory_space<vmem>>, vector<32x64xf32>
    %cst_12 = arith.constant dense<0.000000e+00> : vector<32x128xf32>
    %15 = tpu.matmul %14, %13, %cst_12 {dimension_numbers = #tpu.dot_dimension_numbers<[1], [0], [0], [1], [0, 0, 1, 1], [], []>} : vector<32x64xf32>, vector<64x128xf32>, vector<32x128xf32> -> vector<32x128xf32>
    %c0_13 = arith.constant 0 : index
    %c0_14 = arith.constant 0 : index
    %16 = vector.load %arg7[%c0_13, %c0_14] : memref<32x1xf32, #tpu.memory_space<vmem>>, vector<32x1xf32>
    %17 = vector.broadcast %16 : vector<32x1xf32> to vector<32x128xf32>
    %18 = arith.addf %15, %17 : vector<32x128xf32>
    %cst_15 = arith.constant 0.000000e+00 : f32
    %19 = vector.broadcast %cst_15 : f32 to vector<32x128xf32>
    %20 = arith.maximumf %18, %19 : vector<32x128xf32>
    %c0_16 = arith.constant 0 : index
    %c0_17 = arith.constant 0 : index
    %21 = vector.load %arg8[%c0_16, %c0_17] : memref<1x32xf32, #tpu.memory_space<vmem>>, vector<1x32xf32>
    %cst_18 = arith.constant dense<0.000000e+00> : vector<1x128xf32>
    %22 = tpu.matmul %21, %20, %cst_18 {dimension_numbers = #tpu.dot_dimension_numbers<[1], [0], [0], [1], [0, 0, 1, 1], [], []>} : vector<1x32xf32>, vector<32x128xf32>, vector<1x128xf32> -> vector<1x128xf32>
    %c0_19 = arith.constant 0 : index
    %c0_20 = arith.constant 0 : index
    %23 = vector.load %arg9[%c0_19, %c0_20] : memref<1x1xf32, #tpu.memory_space<vmem>>, vector<1x1xf32>
    %24 = vector.broadcast %23 : vector<1x1xf32> to vector<1x128xf32>
    %25 = arith.addf %22, %24 : vector<1x128xf32>
    %c0_21 = arith.constant 0 : index
    %c0_22 = arith.constant 0 : index
    %26 = vector.load %arg10[%c0_21, %c0_22] : memref<1x128xf32, #tpu.memory_space<vmem>>, vector<1x128xf32>
    tpu.vector_store %arg10[%c0_21, %c0_22], %25 {strides = array<i32>} : memref<1x128xf32, #tpu.memory_space<vmem>>, vector<1x128xf32>,
    return
  }
  func.func @transform_0(%arg0: i32) -> (i32, i32) {
    %c0_i32 = arith.constant 0 : i32
    %c0_i32_0 = arith.constant 0 : i32
    return %c0_i32, %arg0 : i32, i32
  }
  func.func @transform_1(%arg0: i32) -> (i32, i32) {
    %c0_i32 = arith.constant 0 : i32
    %c0_i32_0 = arith.constant 0 : i32
    return %c0_i32, %arg0 : i32, i32
  }
  func.func @transform_2(%arg0: i32) -> (i32, i32) {
    %c0_i32 = arith.constant 0 : i32
    %c0_i32_0 = arith.constant 0 : i32
    %c0_i32_1 = arith.constant 0 : i32
    return %c0_i32, %c0_i32_0 : i32, i32
  }
  func.func @transform_3(%arg0: i32) -> (i32, i32) {
    %c0_i32 = arith.constant 0 : i32
    %c0_i32_0 = arith.constant 0 : i32
    %c0_i32_1 = arith.constant 0 : i32
    return %c0_i32, %c0_i32_0 : i32, i32
  }
  func.func @transform_4(%arg0: i32) -> (i32, i32) {
    %c0_i32 = arith.constant 0 : i32
    %c0_i32_0 = arith.constant 0 : i32
    %c0_i32_1 = arith.constant 0 : i32
    return %c0_i32, %c0_i32_0 : i32, i32
  }
  func.func @transform_5(%arg0: i32) -> (i32, i32) {
    %c0_i32 = arith.constant 0 : i32
    %c0_i32_0 = arith.constant 0 : i32
    %c0_i32_1 = arith.constant 0 : i32
    return %c0_i32, %c0_i32_0 : i32, i32
  }
  func.func @transform_6(%arg0: i32) -> (i32, i32) {
    %c0_i32 = arith.constant 0 : i32
    %c0_i32_0 = arith.constant 0 : i32
    %c0_i32_1 = arith.constant 0 : i32
    return %c0_i32, %c0_i32_0 : i32, i32
  }
  func.func @transform_7(%arg0: i32) -> (i32, i32) {
    %c0_i32 = arith.constant 0 : i32
    %c0_i32_0 = arith.constant 0 : i32
    %c0_i32_1 = arith.constant 0 : i32
    return %c0_i32, %c0_i32_0 : i32, i32
  }
  func.func @transform_8(%arg0: i32) -> (i32, i32) {
    %c0_i32 = arith.constant 0 : i32
    %c0_i32_0 = arith.constant 0 : i32
    %c0_i32_1 = arith.constant 0 : i32
    return %c0_i32, %c0_i32_0 : i32, i32
  }
  func.func @transform_9(%arg0: i32) -> (i32, i32) {
    %c0_i32 = arith.constant 0 : i32
    %c0_i32_0 = arith.constant 0 : i32
    return %c0_i32, %arg0 : i32, i32
  }
}

</mosaic_0001>

<llo_original>
// kernel: tpu_custom_call.1
$region0: #{tpu_custom_call.1}
  #allocation0 [shape = 'u32[]', space=smem, size = 0x4, offset = 0x4, fixed_abs, tag = 'smem constant byte address 0x4 - core index']
  #allocation1 [shape = 'u32[144,128]{1,0:T(1,128)}', space=vmem, size = 0x12000, scoped, tag = 'internal scratch']
  #allocation2 [shape = 'f32[1,1]{1,0:T(1,128)S(1)}', space=vmem, size = 0x200, scoped, tag = 'scoped memory for tpu_custom_call.1']
  %s0 = inlined_call_operand.vmem [shape: f32[3,128], index: 0, kind: input, shape index: {}]
  %s1 = inlined_call_operand.vmem [shape: f32[1,128], index: 1, kind: input, shape index: {}]
  %s2 = inlined_call_operand.vmem [shape: f32[64,3], index: 2, kind: input, shape index: {}]
  %s3 = inlined_call_operand.vmem [shape: f32[64,1], index: 3, kind: input, shape index: {}]
  %s4 = inlined_call_operand.vmem [shape: f32[64,1], index: 4, kind: input, shape index: {}]
  %s5 = inlined_call_operand.vmem [shape: f32[32,64], index: 5, kind: input, shape index: {}]
  %s6 = inlined_call_operand.vmem [shape: f32[32,1], index: 6, kind: input, shape index: {}]
  %s7 = inlined_call_operand.vmem [shape: f32[1,32], index: 7, kind: input, shape index: {}]
  %s8 = inlined_call_operand.<no memory space> [shape: f32[1,1], index: 8, kind: input, shape index: {}]
  %s9 = inlined_call_operand.hbm [shape: f32[1,128], index: 9, kind: output, shape index: {}]
  %s10 = sld [smem:[#allocation0]]
  $region46: #{tpu_custom_call.1} parent=0
    _
  %s12 = ssub.s32 1, %s10
  %s13 = scalar_select 0, %s12, %s10
  %v14 = vstv %s8
  %15 = vst [vmem:[#allocation2] sm:$0x1] %v14
  $region1: #{tpu_custom_call.1} parent=0
    #allocation3 [shape = 'u8[512]{0}', space=vmem, size = 0x400, scoped, tag = 'output window, operand 0, single buffered']
    #allocation4 [shape = 's32[1]{0}', space=sflag, size = 0x4, scoped, tag = 'scoped memory for tpu_custom_call.1']
    %16 = vsyncpa [#allocation4], 0
    // Predicated region
    $region2: #{tpu_custom_call.1} parent=1 // pred_check
      _
    $region3: #{tpu_custom_call.1} parent=1 // pred_check_branch
      %18 = sbr.rel (0) target = $region5
    $region4: #{tpu_custom_call.1} parent=1 // pred_region
      _
    $region5: #{tpu_custom_call.1} parent=1 // pred_fallthru
      _
    // Predicated region
    $region6: #{tpu_custom_call.1} parent=1 // pred_check
      _
    $region7: #{tpu_custom_call.1} parent=1 // pred_check_branch
      %20 = sbr.rel (0) target = $region9
    $region8: #{tpu_custom_call.1} parent=1 // pred_region
      _
    $region9: #{tpu_custom_call.1} parent=1 // pred_fallthru
      _
    // Predicated region
    $region10: #{tpu_custom_call.1} parent=1 // pred_check
      _
    $region11: #{tpu_custom_call.1} parent=1 // pred_check_branch
      %22 = sbr.rel (0) target = $region13
    $region12: #{tpu_custom_call.1} parent=1 // pred_region
      _
    $region13: #{tpu_custom_call.1} parent=1 // pred_fallthru
      _
    // Predicated region
    $region14: #{tpu_custom_call.1} parent=1 // pred_check
      _
    $region15: #{tpu_custom_call.1} parent=1 // pred_check_branch
      %24 = sbr.rel (0) target = $region17
    $region16: #{tpu_custom_call.1} parent=1 // pred_region
      _
    $region17: #{tpu_custom_call.1} parent=1 // pred_fallthru
      _
    // Predicated region
    $region18: #{tpu_custom_call.1} parent=1 // pred_check
      _
    $region19: #{tpu_custom_call.1} parent=1 // pred_check_branch
      %26 = sbr.rel (0) target = $region21
    $region20: #{tpu_custom_call.1} parent=1 // pred_region
      _
    $region21: #{tpu_custom_call.1} parent=1 // pred_fallthru
      _
    // Predicated region
    $region22: #{tpu_custom_call.1} parent=1 // pred_check
      _
    $region23: #{tpu_custom_call.1} parent=1 // pred_check_branch
      %28 = sbr.rel (0) target = $region25
    $region24: #{tpu_custom_call.1} parent=1 // pred_region
      _
    $region25: #{tpu_custom_call.1} parent=1 // pred_fallthru
      _
    // Predicated region
    $region26: #{tpu_custom_call.1} parent=1 // pred_check
      _
    $region27: #{tpu_custom_call.1} parent=1 // pred_check_branch
      %30 = sbr.rel (0) target = $region29
    $region28: #{tpu_custom_call.1} parent=1 // pred_region
      _
    $region29: #{tpu_custom_call.1} parent=1 // pred_fallthru
      _
    // Predicated region
    $region30: #{tpu_custom_call.1} parent=1 // pred_check
      _
    $region31: #{tpu_custom_call.1} parent=1 // pred_check_branch
      %32 = sbr.rel (0) target = $region33
    $region32: #{tpu_custom_call.1} parent=1 // pred_region
      _
    $region33: #{tpu_custom_call.1} parent=1 // pred_fallthru
      _
    // Predicated region
    $region34: #{tpu_custom_call.1} parent=1 // pred_check
      _
    $region35: #{tpu_custom_call.1} parent=1 // pred_check_branch
      %34 = sbr.rel (0) target = $region37
    $region36: #{tpu_custom_call.1} parent=1 // pred_region
      _
    $region37: #{tpu_custom_call.1} parent=1 // pred_fallthru
      _
    %v35 = vld [vmem:[%s0] sm:$0x7]
    %v36 = vld [vmem:[%s1] sm:$0x1]
    %v37 = vld [vmem:[%s2] sm:$0xff]
    %v38 = vld [vmem:[%s2 + $0x8] sm:$0xff]
    %v39 = vld [vmem:[%s2 + $0x10] sm:$0xff]
    %v40 = vld [vmem:[%s2 + $0x18] sm:$0xff]
    %v41 = vld [vmem:[%s2 + $0x20] sm:$0xff]
    %v42 = vld [vmem:[%s2 + $0x28] sm:$0xff]
    %v43 = vld [vmem:[%s2 + $0x30] sm:$0xff]
    %v44 = vld [vmem:[%s2 + $0x38] sm:$0xff]
    %v45 = vld [vmem:[%s3] sm:$0xff]
    %v46 = vld [vmem:[%s3 + $0x8] sm:$0xff]
    %v47 = vld [vmem:[%s3 + $0x10] sm:$0xff]
    %v48 = vld [vmem:[%s3 + $0x18] sm:$0xff]
    %v49 = vld [vmem:[%s3 + $0x20] sm:$0xff]
    %v50 = vld [vmem:[%s3 + $0x28] sm:$0xff]
    %v51 = vld [vmem:[%s3 + $0x30] sm:$0xff]
    %v52 = vld [vmem:[%s3 + $0x38] sm:$0xff]
    %54 = vset.pattern.permute.xlu0 0
    %55 = vperm.xlu0 %54, %v45
    %v56 = vpop.permute.xlu0 %55
    %59 = vset.pattern.permute.xlu0 0
    %60 = vperm.xlu0 %59, %v46
    %v61 = vpop.permute.xlu0 %60
    %64 = vset.pattern.permute.xlu0 0
    %65 = vperm.xlu0 %64, %v47
    %v66 = vpop.permute.xlu0 %65
    %69 = vset.pattern.permute.xlu0 0
    %70 = vperm.xlu0 %69, %v48
    %v71 = vpop.permute.xlu0 %70
    %74 = vset.pattern.permute.xlu0 0
    %75 = vperm.xlu0 %74, %v49
    %v76 = vpop.permute.xlu0 %75
    %79 = vset.pattern.permute.xlu0 0
    %80 = vperm.xlu0 %79, %v50
    %v81 = vpop.permute.xlu0 %80
    %84 = vset.pattern.permute.xlu0 0
    %85 = vperm.xlu0 %84, %v51
    %v86 = vpop.permute.xlu0 %85
    %89 = vset.pattern.permute.xlu0 0
    %90 = vperm.xlu0 %89, %v52
    %v91 = vpop.permute.xlu0 %90
    %v94 = vlaneseq
    %v95 = vshrl.u32 %v94, 7
    %v96 = vsub.s32 0, %v95
    %v97 = vrot.slane %v36, %v96
    %v99 = vmul.f32 %v56, %v97
    %v100 = vmul.f32 %v61, %v97
    %v101 = vmul.f32 %v66, %v97
    %v102 = vmul.f32 %v71, %v97
    %v103 = vmul.f32 %v76, %v97
    %v104 = vmul.f32 %v81, %v97
    %v105 = vmul.f32 %v86, %v97
    %v106 = vmul.f32 %v91, %v97
    %vm107 = vcmask 23552
    %v109 = vsel %vm107, %v37, 0
    %v112 = vsel %vm107, %v38, 0
    %v115 = vsel %vm107, %v39, 0
    %v118 = vsel %vm107, %v40, 0
    %v121 = vsel %vm107, %v41, 0
    %v124 = vsel %vm107, %v42, 0
    %v127 = vsel %vm107, %v43, 0
    %v130 = vsel %vm107, %v44, 0
    %vm132 = vcmask 1042432
    %v134 = vsel %vm132, %v35, 0
    %136 = vmatprep.subr.mxu0 0.0
    %137 = vmatpush1.msra.mxu0 0.0
    %138 = vmatprep.subr.mxu0 0.0
    %139 = vmatpush1.msra.mxu0 0.0
    %140 = vmatprep.subr.mxu0 0.0
    %141 = vmatpush1.msra.mxu0 0.0
    %142 = vmatprep.subr.mxu0 0.0
    %143 = vmatpush1.msra.mxu0 0.0
    %144 = vmatprep.subr.mxu0 0.0
    %145 = vmatpush1.msra.mxu0 0.0
    %146 = vmatprep.subr.mxu0 0.0
    %147 = vmatpush1.msra.mxu0 0.0
    %148 = vmatprep.subr.mxu0 0.0
    %149 = vmatpush1.msra.mxu0 0.0
    %150 = vmatprep.subr.mxu0 0.0
    %151 = vmatpush1.msra.mxu0 0.0
    %152 = vmatprep.subr.mxu0 0.0
    %153 = vmatpush1.msra.mxu0 0.0
    %154 = vmatprep.subr.mxu0 0.0
    %155 = vmatpush1.msra.mxu0 0.0
    %156 = vmatprep.subr.mxu0 0.0
    %157 = vmatpush1.msra.mxu0 0.0
    %158 = vmatprep.subr.mxu0 0.0
    %159 = vmatpush1.msra.mxu0 0.0
    %160 = vmatprep.subr.mxu0 0.0
    %161 = vmatpush1.msra.mxu0 0.0
    %162 = vmatprep.subr.mxu0 0.0
    %163 = vmatpush1.msra.mxu0 0.0
    %164 = vmatprep.subr.mxu0 0.0
    %165 = vmatpush1.msra.mxu0 0.0
    %166 = vmatprep.subr.mxu0 0.0
    %167 = vmatpush1.msra.mxu0 %v134
    %168 = vmatprep.subr.mxu0 0.0
    %169 = vmatpush2.msra.mxu0 0.0
    %170 = vmatprep.subr.mxu0 0.0
    %171 = vmatpush2.msra.mxu0 0.0
    %172 = vmatprep.subr.mxu0 0.0
    %173 = vmatpush2.msra.mxu0 0.0
    %174 = vmatprep.subr.mxu0 0.0
    %175 = vmatpush2.msra.mxu0 0.0
    %176 = vmatprep.subr.mxu0 0.0
    %177 = vmatpush2.msra.mxu0 0.0
    %178 = vmatprep.subr.mxu0 0.0
    %179 = vmatpush2.msra.mxu0 0.0
    %180 = vmatprep.subr.mxu0 0.0
    %181 = vmatpush2.msra.mxu0 0.0
    %182 = vmatprep.subr.mxu0 0.0
    %183 = vmatpush2.msra.mxu0 0.0
    %184 = vmatprep.subr.mxu0 0.0
    %185 = vmatpush2.msra.mxu0 0.0
    %186 = vmatprep.subr.mxu0 0.0
    %187 = vmatpush2.msra.mxu0 0.0
    %188 = vmatprep.subr.mxu0 0.0
    %189 = vmatpush2.msra.mxu0 0.0
    %190 = vmatprep.subr.mxu0 0.0
    %191 = vmatpush2.msra.mxu0 0.0
    %192 = vmatprep.subr.mxu0 0.0
    %193 = vmatpush2.msra.mxu0 0.0
    %194 = vmatprep.subr.mxu0 0.0
    %195 = vmatpush2.msra.mxu0 0.0
    %196 = vmatprep.subr.mxu0 0.0
    %197 = vmatpush2.msra.mxu0 0.0
    %198 = vmatprep.subr.mxu0 0.0
    %199 = vmatpush2.msra.mxu0 0.0
    %200 = vmatprep.mubr.f32.mxu0 0.0
    %201 = vmatmul.mubr.f32.gmra.mxu0 %v109
    %v202 = vpop.f32.mrf.mxu0
    %v203 = vadd.f32 %v99, %v202
    %v204 = vpop.f32.mrf.mxu0
    %205 = vmatprep.mubr.f32.mxu0 0.0
    %206 = vmatmul.mubr.f32.gmra.mxu0 %v112
    %v207 = vpop.f32.mrf.mxu0
    %v208 = vadd.f32 %v100, %v207
    %v209 = vpop.f32.mrf.mxu0
    %210 = vmatprep.mubr.f32.mxu0 0.0
    %211 = vmatmul.mubr.f32.gmra.mxu0 %v115
    %v212 = vpop.f32.mrf.mxu0
    %v213 = vadd.f32 %v101, %v212
    %v214 = vpop.f32.mrf.mxu0
    %215 = vmatprep.mubr.f32.mxu0 0.0
    %216 = vmatmul.mubr.f32.gmra.mxu0 %v118
    %v217 = vpop.f32.mrf.mxu0
    %v218 = vadd.f32 %v102, %v217
    %v219 = vpop.f32.mrf.mxu0
    %220 = vmatprep.mubr.f32.mxu0 0.0
    %221 = vmatmul.mubr.f32.gmra.mxu0 %v121
    %v222 = vpop.f32.mrf.mxu0
    %v223 = vadd.f32 %v103, %v222
    %v224 = vpop.f32.mrf.mxu0
    %225 = vmatprep.mubr.f32.mxu0 0.0
    %226 = vmatmul.mubr.f32.gmra.mxu0 %v124
    %v227 = vpop.f32.mrf.mxu0
    %v228 = vadd.f32 %v104, %v227
    %v229 = vpop.f32.mrf.mxu0
    %230 = vmatprep.mubr.f32.mxu0 0.0
    %231 = vmatmul.mubr.f32.gmra.mxu0 %v127
    %v232 = vpop.f32.mrf.mxu0
    %v233 = vadd.f32 %v105, %v232
    %v234 = vpop.f32.mrf.mxu0
    %235 = vmatprep.mubr.f32.mxu0 0.0
    %236 = vmatmul.mubr.f32.gmra.mxu0 %v130
    %v237 = vpop.f32.mrf.mxu0
    %v238 = vadd.f32 %v106, %v237
    %v239 = vpop.f32.mrf.mxu0
    %240 = vdwg.mxu0
    %v241 = vld [vmem:[%s4] sm:$0xff]
    %v242 = vld [vmem:[%s4 + $0x8] sm:$0xff]
    %v243 = vld [vmem:[%s4 + $0x10] sm:$0xff]
    %v244 = vld [vmem:[%s4 + $0x18] sm:$0xff]
    %v245 = vld [vmem:[%s4 + $0x20] sm:$0xff]
    %v246 = vld [vmem:[%s4 + $0x28] sm:$0xff]
    %v247 = vld [vmem:[%s4 + $0x30] sm:$0xff]
    %v248 = vld [vmem:[%s4 + $0x38] sm:$0xff]
    %250 = vset.pattern.permute.xlu0 0
    %251 = vperm.xlu0 %250, %v241
    %v252 = vpop.permute.xlu0 %251
    %255 = vset.pattern.permute.xlu0 0
    %256 = vperm.xlu0 %255, %v242
    %v257 = vpop.permute.xlu0 %256
    %260 = vset.pattern.permute.xlu0 0
    %261 = vperm.xlu0 %260, %v243
    %v262 = vpop.permute.xlu0 %261
    %265 = vset.pattern.permute.xlu0 0
    %266 = vperm.xlu0 %265, %v244
    %v267 = vpop.permute.xlu0 %266
    %270 = vset.pattern.permute.xlu0 0
    %271 = vperm.xlu0 %270, %v245
    %v272 = vpop.permute.xlu0 %271
    %275 = vset.pattern.permute.xlu0 0
    %276 = vperm.xlu0 %275, %v246
    %v277 = vpop.permute.xlu0 %276
    %280 = vset.pattern.permute.xlu0 0
    %281 = vperm.xlu0 %280, %v247
    %v282 = vpop.permute.xlu0 %281
    %285 = vset.pattern.permute.xlu0 0
    %286 = vperm.xlu0 %285, %v248
    %v287 = vpop.permute.xlu0 %286
    %v289 = vadd.f32 %v203, %v252
    %v290 = vadd.f32 %v208, %v257
    %v291 = vadd.f32 %v213, %v262
    %v292 = vadd.f32 %v218, %v267
    %v293 = vadd.f32 %v223, %v272
    %v294 = vadd.f32 %v228, %v277
    %v295 = vadd.f32 %v233, %v282
    %v296 = vadd.f32 %v238, %v287
    %v297 = vmax.f32 %v289, 0.0
    %v298 = vmax.f32 %v290, 0.0
    %v299 = vmax.f32 %v291, 0.0
    %v300 = vmax.f32 %v292, 0.0
    %v301 = vmax.f32 %v293, 0.0
    %v302 = vmax.f32 %v294, 0.0
    %v303 = vmax.f32 %v295, 0.0
    %v304 = vmax.f32 %v296, 0.0
    %v305 = vld [vmem:[%s5] sm:$0xff]
    %v306 = vld [vmem:[%s5 + $0x8] sm:$0xff]
    %v307 = vld [vmem:[%s5 + $0x10] sm:$0xff]
    %v308 = vld [vmem:[%s5 + $0x18] sm:$0xff]
    %v309 = vld [vmem:[%s6] sm:$0xff]
    %v310 = vld [vmem:[%s6 + $0x8] sm:$0xff]
    %v311 = vld [vmem:[%s6 + $0x10] sm:$0xff]
    %v312 = vld [vmem:[%s6 + $0x18] sm:$0xff]
    %314 = vset.pattern.permute.xlu0 0
    %315 = vperm.xlu0 %314, %v309
    %v316 = vpop.permute.xlu0 %315
    %319 = vset.pattern.permute.xlu0 0
    %320 = vperm.xlu0 %319, %v310
    %v321 = vpop.permute.xlu0 %320
    %324 = vset.pattern.permute.xlu0 0
    %325 = vperm.xlu0 %324, %v311
    %v326 = vpop.permute.xlu0 %325
    %329 = vset.pattern.permute.xlu0 0
    %330 = vperm.xlu0 %329, %v312
    %v331 = vpop.permute.xlu0 %330
    %vm333 = vcmask 523264
    %v335 = vsel %vm333, %v305, 0
    %v338 = vsel %vm333, %v306, 0
    %v341 = vsel %vm333, %v307, 0
    %v344 = vsel %vm333, %v308, 0
    %346 = vmatprep.subr.mxu0 0.0
    %347 = vmatpush1.msra.mxu0 0.0
    %348 = vmatprep.subr.mxu0 0.0
    %349 = vmatpush1.msra.mxu0 0.0
    %350 = vmatprep.subr.mxu0 0.0
    %351 = vmatpush1.msra.mxu0 0.0
    %352 = vmatprep.subr.mxu0 0.0
    %353 = vmatpush1.msra.mxu0 0.0
    %354 = vmatprep.subr.mxu0 0.0
    %355 = vmatpush1.msra.mxu0 0.0
    %356 = vmatprep.subr.mxu0 0.0
    %357 = vmatpush1.msra.mxu0 0.0
    %358 = vmatprep.subr.mxu0 0.0
    %359 = vmatpush1.msra.mxu0 0.0
    %360 = vmatprep.subr.mxu0 0.0
    %361 = vmatpush1.msra.mxu0 0.0
    %362 = vmatprep.subr.mxu0 0.0
    %363 = vmatpush1.msra.mxu0 %v304
    %364 = vmatprep.subr.mxu0 0.0
    %365 = vmatpush1.msra.mxu0 %v303
    %366 = vmatprep.subr.mxu0 0.0
    %367 = vmatpush1.msra.mxu0 %v302
    %368 = vmatprep.subr.mxu0 0.0
    %369 = vmatpush1.msra.mxu0 %v301
    %370 = vmatprep.subr.mxu0 0.0
    %371 = vmatpush1.msra.mxu0 %v300
    %372 = vmatprep.subr.mxu0 0.0
    %373 = vmatpush1.msra.mxu0 %v299
    %374 = vmatprep.subr.mxu0 0.0
    %375 = vmatpush1.msra.mxu0 %v298
    %376 = vmatprep.subr.mxu0 0.0
    %377 = vmatpush1.msra.mxu0 %v297
    %378 = vmatprep.subr.mxu0 0.0
    %379 = vmatpush2.msra.mxu0 0.0
    %380 = vmatprep.subr.mxu0 0.0
    %381 = vmatpush2.msra.mxu0 0.0
    %382 = vmatprep.subr.mxu0 0.0
    %383 = vmatpush2.msra.mxu0 0.0
    %384 = vmatprep.subr.mxu0 0.0
    %385 = vmatpush2.msra.mxu0 0.0
    %386 = vmatprep.subr.mxu0 0.0
    %387 = vmatpush2.msra.mxu0 0.0
    %388 = vmatprep.subr.mxu0 0.0
    %389 = vmatpush2.msra.mxu0 0.0
    %390 = vmatprep.subr.mxu0 0.0
    %391 = vmatpush2.msra.mxu0 0.0
    %392 = vmatprep.subr.mxu0 0.0
    %393 = vmatpush2.msra.mxu0 0.0
    %394 = vmatprep.subr.mxu0 0.0
    %395 = vmatpush2.msra.mxu0 0.0
    %396 = vmatprep.subr.mxu0 0.0
    %397 = vmatpush2.msra.mxu0 0.0
    %398 = vmatprep.subr.mxu0 0.0
    %399 = vmatpush2.msra.mxu0 0.0
    %400 = vmatprep.subr.mxu0 0.0
    %401 = vmatpush2.msra.mxu0 0.0
    %402 = vmatprep.subr.mxu0 0.0
    %403 = vmatpush2.msra.mxu0 0.0
    %404 = vmatprep.subr.mxu0 0.0
    %405 = vmatpush2.msra.mxu0 0.0
    %406 = vmatprep.subr.mxu0 0.0
    %407 = vmatpush2.msra.mxu0 0.0
    %408 = vmatprep.subr.mxu0 0.0
    %409 = vmatpush2.msra.mxu0 0.0
    %410 = vmatprep.mubr.f32.mxu0 0.0
    %411 = vmatmul.mubr.f32.gmra.mxu0 %v335
    %v412 = vpop.f32.mrf.mxu0
    %v413 = vadd.f32 %v316, %v412
    %v414 = vpop.f32.mrf.mxu0
    %415 = vmatprep.mubr.f32.mxu0 0.0
    %416 = vmatmul.mubr.f32.gmra.mxu0 %v338
    %v417 = vpop.f32.mrf.mxu0
    %v418 = vadd.f32 %v321, %v417
    %v419 = vpop.f32.mrf.mxu0
    %420 = vmatprep.mubr.f32.mxu0 0.0
    %421 = vmatmul.mubr.f32.gmra.mxu0 %v341
    %v422 = vpop.f32.mrf.mxu0
    %v423 = vadd.f32 %v326, %v422
    %v424 = vpop.f32.mrf.mxu0
    %425 = vmatprep.mubr.f32.mxu0 0.0
    %426 = vmatmul.mubr.f32.gmra.mxu0 %v344
    %v427 = vpop.f32.mrf.mxu0
    %v428 = vadd.f32 %v331, %v427
    %v429 = vpop.f32.mrf.mxu0
    %430 = vdwg.mxu0
    %v431 = vmax.f32 %v413, 0.0
    %v432 = vmax.f32 %v418, 0.0
    %v433 = vmax.f32 %v423, 0.0
    %v434 = vmax.f32 %v428, 0.0
    %v435 = vld [vmem:[%s7] sm:$0x1]
    %v436 = vld [vmem:[#allocation2] sm:$0x1]
    %438 = vset.pattern.permute.xlu0 0
    %439 = vperm.xlu0 %438, %v436
    %v440 = vpop.permute.xlu0 %439
    %v442 = vlaneseq
    %v443 = vshrl.u32 %v442, 7
    %v444 = vsub.s32 0, %v443
    %v445 = vrot.slane %v440, %v444
    %vm446 = vcmask 261120
    %v448 = vsel %vm446, %v435, 0
    %450 = vmatprep.subr.mxu0 0.0
    %451 = vmatpush1.msra.mxu0 0.0
    %452 = vmatprep.subr.mxu0 0.0
    %453 = vmatpush1.msra.mxu0 0.0
    %454 = vmatprep.subr.mxu0 0.0
    %455 = vmatpush1.msra.mxu0 0.0
    %456 = vmatprep.subr.mxu0 0.0
    %457 = vmatpush1.msra.mxu0 0.0
    %458 = vmatprep.subr.mxu0 0.0
    %459 = vmatpush1.msra.mxu0 0.0
    %460 = vmatprep.subr.mxu0 0.0
    %461 = vmatpush1.msra.mxu0 0.0
    %462 = vmatprep.subr.mxu0 0.0
    %463 = vmatpush1.msra.mxu0 0.0
    %464 = vmatprep.subr.mxu0 0.0
    %465 = vmatpush1.msra.mxu0 0.0
    %466 = vmatprep.subr.mxu0 0.0
    %467 = vmatpush1.msra.mxu0 0.0
    %468 = vmatprep.subr.mxu0 0.0
    %469 = vmatpush1.msra.mxu0 0.0
    %470 = vmatprep.subr.mxu0 0.0
    %471 = vmatpush1.msra.mxu0 0.0
    %472 = vmatprep.subr.mxu0 0.0
    %473 = vmatpush1.msra.mxu0 0.0
    %474 = vmatprep.subr.mxu0 0.0
    %475 = vmatpush1.msra.mxu0 %v434
    %476 = vmatprep.subr.mxu0 0.0
    %477 = vmatpush1.msra.mxu0 %v433
    %478 = vmatprep.subr.mxu0 0.0
    %479 = vmatpush1.msra.mxu0 %v432
    %480 = vmatprep.subr.mxu0 0.0
    %481 = vmatpush1.msra.mxu0 %v431
    %482 = vmatprep.subr.mxu0 0.0
    %483 = vmatpush2.msra.mxu0 0.0
    %484 = vmatprep.subr.mxu0 0.0
    %485 = vmatpush2.msra.mxu0 0.0
    %486 = vmatprep.subr.mxu0 0.0
    %487 = vmatpush2.msra.mxu0 0.0
    %488 = vmatprep.subr.mxu0 0.0
    %489 = vmatpush2.msra.mxu0 0.0
    %490 = vmatprep.subr.mxu0 0.0
    %491 = vmatpush2.msra.mxu0 0.0
    %492 = vmatprep.subr.mxu0 0.0
    %493 = vmatpush2.msra.mxu0 0.0
    %494 = vmatprep.subr.mxu0 0.0
    %495 = vmatpush2.msra.mxu0 0.0
    %496 = vmatprep.subr.mxu0 0.0
    %497 = vmatpush2.msra.mxu0 0.0
    %498 = vmatprep.subr.mxu0 0.0
    %499 = vmatpush2.msra.mxu0 0.0
    %500 = vmatprep.subr.mxu0 0.0
    %501 = vmatpush2.msra.mxu0 0.0
    %502 = vmatprep.subr.mxu0 0.0
    %503 = vmatpush2.msra.mxu0 0.0
    %504 = vmatprep.subr.mxu0 0.0
    %505 = vmatpush2.msra.mxu0 0.0
    %506 = vmatprep.subr.mxu0 0.0
    %507 = vmatpush2.msra.mxu0 0.0
    %508 = vmatprep.subr.mxu0 0.0
    %509 = vmatpush2.msra.mxu0 0.0
    %510 = vmatprep.subr.mxu0 0.0
    %511 = vmatpush2.msra.mxu0 0.0
    %512 = vmatprep.subr.mxu0 0.0
    %513 = vmatpush2.msra.mxu0 0.0
    %514 = vmatprep.mubr.f32.mxu0 0.0
    %515 = vmatmul.mubr.f32.gmra.mxu0 %v448
    %v516 = vpop.f32.mrf.mxu0
    %v517 = vadd.f32 %v445, %v516
    %v518 = vpop.f32.mrf.mxu0
    %519 = vdwg.mxu0
    %520 = vst [vmem:[#allocation3] sm:$0x1] %v517
    // Predicated region
    $region38: #{tpu_custom_call.1} parent=1 // pred_check
      _
    $region39: #{tpu_custom_call.1} parent=1 // pred_check_branch
      %522 = sbr.rel (0) target = $region41
    $region40: #{tpu_custom_call.1} parent=1 // pred_region
      %s524 = ssub.s32 16, 16
      %525 = vsyncadd [#allocation4], %s524
      %s527 = sshll.u32 [#allocation3], 4
      %s528 = int_to_ptr.vmem [resolvable:$true] %s527
      %530 = dma.vmem_to_hbm [thread:$0]  %s528, 16, %s9, [#allocation4]
    $region41: #{tpu_custom_call.1} parent=1 // pred_fallthru
      _
    // Predicated region
    $region42: #{tpu_custom_call.1} parent=1 // pred_check
      _
    $region43: #{tpu_custom_call.1} parent=1 // pred_check_branch
      %532 = sbr.rel (0) target = $region45
    $region44: #{tpu_custom_call.1} parent=1 // pred_region
      %533 = dma.done [#allocation4], 16
    $region45: #{tpu_custom_call.1} parent=1 // pred_fallthru
      _
    %534 = vsyncpa [#allocation4], 1

</llo_original>
